<compile_context>
chip_gen: v5e
topology: v5e:2x2
jax: 0.10.0
libtpu: 0.0.40
codegen_flags: <defaults>
</compile_context>

<pallas_src>
import functools

import jax
import jax.numpy as jnp
from jax.experimental import pallas as pl
from jax.experimental.pallas import tpu as pltpu

OUT_PAD = 8  # final layer padded 3 -> 8 lanes (compact, row-dense writeback)


def mlp_kernel(x_ref, w1_ref, b1_ref, w2_ref, b2_ref, w3_ref, b3_ref, o_ref):
    # x tile and weights are bf16; all accumulation / bias / ReLU in f32.
    x = x_ref[...]
    h1 = jnp.dot(x, w1_ref[...], preferred_element_type=jnp.float32) + b1_ref[...]
    h1 = jnp.maximum(h1, 0.0)
    h2 = (
        jnp.dot(h1.astype(jnp.bfloat16), w2_ref[...], preferred_element_type=jnp.float32)
        + b2_ref[...]
    )
    h2 = jnp.maximum(h2, 0.0)
    y = (
        jnp.dot(h2.astype(jnp.bfloat16), w3_ref[...], preferred_element_type=jnp.float32)
        + b3_ref[...]
    )
    o_ref[...] = y.astype(o_ref.dtype)


def _cdiv(a, b):
    return -(-a // b)


def _round_up(n, m):
    return ((n + m - 1) // m) * m


def _choose_tile(B, tb):
    """Pick (TB, Bp): derive TB from the step count so tail padding stays
    small, and keep >=2 grid steps for non-tiny batches (v7x megacore)."""
    tb = max(128, tb)
    n_steps = max(1, _cdiv(B, tb))
    if n_steps == 1 and B >= 256:
        n_steps = 2  # keep both v7x TensorCores busy
    if n_steps == 1:
        TB = _round_up(B, 8)
    else:
        TB = _round_up(_cdiv(B, n_steps), 128)
    Bp = _round_up(B, TB)
    return TB, Bp


def prepare_params(params):
    """One-time operand prep (hoisted out of the per-call hot path):
    bf16 weight casts, f32 biases, final layer zero-padded 3 -> OUT_PAD."""
    w3 = params["w3"]
    b3 = params["b3"]
    w3p = jnp.zeros((w3.shape[0], OUT_PAD), jnp.bfloat16).at[:, :3].set(
        w3.astype(jnp.bfloat16)
    )
    b3p = jnp.zeros((1, OUT_PAD), jnp.float32).at[:, :3].set(b3.astype(jnp.float32))
    return {
        "w1": params["w1"].astype(jnp.bfloat16),
        "b1": params["b1"].astype(jnp.float32),
        "w2": params["w2"].astype(jnp.bfloat16),
        "b2": params["b2"].astype(jnp.float32),
        "w3p": w3p,
        "b3p": b3p,
    }


@functools.partial(jax.jit, static_argnames=("tb",))
def simple_room_net(x, prepared, *, tb=4096):
    """Forward pass. x: (B, input_size) f32. prepared: output of prepare_params.

    tb: target rows per grid step (multiple of 128 recommended).
    """
    B, in_size = x.shape

    w1, b1 = prepared["w1"], prepared["b1"]
    w2, b2 = prepared["w2"], prepared["b2"]
    w3p, b3p = prepared["w3p"], prepared["b3p"]

    TB, Bp = _choose_tile(B, tb)
    x_bf = x.astype(jnp.bfloat16)
    if Bp != B:
        x_bf = jnp.pad(x_bf, ((0, Bp - B), (0, 0)))

    grid = (Bp // TB,)

    # Weights/biases: constant index_map -> DMA'd once, VMEM-resident.
    resident = lambda a: pl.BlockSpec(a.shape, lambda i: tuple(0 for _ in a.shape))
    in_specs = [
        pl.BlockSpec((TB, in_size), lambda i: (i, 0)),  # x: tiled over batch
        # TODO(synk): if xprof shows exposed x-tile DMA, add
        # pipeline_mode=pl.Buffered(3) to the x spec above.
        resident(w1),
        resident(b1),
        resident(w2),
        resident(b2),
        resident(w3p),
        resident(b3p),
    ]
    out_specs = pl.BlockSpec((TB, OUT_PAD), lambda i: (i, 0))

    # Honest estimate: true batch rows, 3 real output lanes.
    flops = 2 * B * (in_size * 64 + 64 * 32 + 32 * 3)
    bytes_accessed = (
        x_bf.size * 2
        + (w1.size + w2.size + w3p.size) * 2
        + (b1.size + b2.size + b3p.size) * 4
        + Bp * OUT_PAD * 4
    )

    out = pl.pallas_call(
        mlp_kernel,
        out_shape=jax.ShapeDtypeStruct((Bp, OUT_PAD), jnp.float32),
        grid=grid,
        in_specs=in_specs,
        out_specs=out_specs,
        compiler_params=pltpu.CompilerParams(dimension_semantics=("parallel",)),
        cost_estimate=pl.CostEstimate(
            flops=flops, transcendentals=0, bytes_accessed=bytes_accessed
        ),
    )(x_bf, w1, b1, w2, b2, w3p, b3p)

    # Drop batch padding and the 5 zero-padded output lanes.
    return out[:B, :3]


def init_params(key, input_size):
    """Deterministic init; weights stored as (in, out) = PyTorch W.T."""
    ks = jax.random.split(key, 6)

    def lin(kw, kb, fan_in, fan_out):
        bound = 1.0 / jnp.sqrt(fan_in)
        w = jax.random.uniform(kw, (fan_in, fan_out), jnp.float32, -bound, bound)
        b = jax.random.uniform(kb, (1, fan_out), jnp.float32, -bound, bound)
        return w, b

    w1, b1 = lin(ks[0], ks[1], input_size, 64)
    w2, b2 = lin(ks[2], ks[3], 64, 32)
    w3, b3 = lin(ks[4], ks[5], 32, 3)
    return {"w1": w1, "b1": b1, "w2": w2, "b2": b2, "w3": w3, "b3": b3}


def _reference(x, params):
    h = jnp.maximum(x @ params["w1"] + params["b1"], 0.0)
    h = jnp.maximum(h @ params["w2"] + params["b2"], 0.0)
    return h @ params["w3"] + params["b3"]


if __name__ == "__main__":
    key = jax.random.PRNGKey(0)
    k_x1, k_x2, k_p = jax.random.split(key, 3)

    input_size = 32  # flattened room-feature vector
    params = init_params(k_p, input_size)
    prepared = prepare_params(params)  # one-time weight prep (hoisted)

    # Case 1: tiny batch -> single-tile path (default large tb clamps down).
    x_small = jax.random.normal(k_x1, (13, input_size), jnp.float32)
    out_small = jax.block_until_ready(simple_room_net(x_small, prepared))
    ref_small = _reference(x_small, params)
    assert out_small.shape == (13, 3)
    assert jnp.allclose(out_small, ref_small, atol=5e-2, rtol=5e-2), (
        f"max abs err {jnp.max(jnp.abs(out_small - ref_small))}"
    )

    # Case 2: larger batch with tb=128 -> 3-step grid incl. a padded tail
    # tile, exercising multi-step pipelining + batch padding.
    x_big = jax.random.normal(k_x2, (300, input_size), jnp.float32)
    out_big = jax.block_until_ready(simple_room_net(x_big, prepared, tb=128))
    ref_big = _reference(x_big, params)
    assert out_big.shape == (300, 3)
    assert jnp.allclose(out_big, ref_big, atol=5e-2, rtol=5e-2), (
        f"max abs err {jnp.max(jnp.abs(out_big - ref_big))}"
    )

    print("KERNEL_OK")
</pallas_src>

<mosaic_0001>
module attributes {stable_mosaic.version = 11 : i64} {
  func.func @mlp_kernel(%arg0: i32, %arg1: memref<16x32xbf16, #tpu.memory_space<vmem>>, %arg2: memref<32x64xbf16, #tpu.memory_space<vmem>>, %arg3: memref<1x64xf32, #tpu.memory_space<vmem>>, %arg4: memref<64x32xbf16, #tpu.memory_space<vmem>>, %arg5: memref<1x32xf32, #tpu.memory_space<vmem>>, %arg6: memref<32x8xbf16, #tpu.memory_space<vmem>>, %arg7: memref<1x8xf32, #tpu.memory_space<vmem>>, %arg8: memref<16x8xf32, #tpu.memory_space<vmem>>) attributes {dimension_semantics = [#tpu.dimension_semantics<parallel>], iteration_bounds = array<i64: 1>, scalar_prefetch = 0 : i64, scratch_operands = 0 : i64, tpu.core_type = #tpu.core_type<tc>, window_params = [{transform_indices = @transform_0, window_bounds = array<i64: 16, 32>}, {pipeline_mode = #tpu.pipeline_mode<synchronous>, transform_indices = @transform_1, window_bounds = array<i64: 32, 64>}, {pipeline_mode = #tpu.pipeline_mode<synchronous>, transform_indices = @transform_2, window_bounds = array<i64: 1, 64>}, {pipeline_mode = #tpu.pipeline_mode<synchronous>, transform_indices = @transform_3, window_bounds = array<i64: 64, 32>}, {pipeline_mode = #tpu.pipeline_mode<synchronous>, transform_indices = @transform_4, window_bounds = array<i64: 1, 32>}, {pipeline_mode = #tpu.pipeline_mode<synchronous>, transform_indices = @transform_5, window_bounds = array<i64: 32, 8>}, {pipeline_mode = #tpu.pipeline_mode<synchronous>, transform_indices = @transform_6, window_bounds = array<i64: 1, 8>}, {transform_indices = @transform_7, window_bounds = array<i64: 16, 8>}]} {
    %c0 = arith.constant 0 : index
    %c0_0 = arith.constant 0 : index
    %0 = vector.load %arg1[%c0, %c0_0] : memref<16x32xbf16, #tpu.memory_space<vmem>>, vector<16x32xbf16>
    %c0_1 = arith.constant 0 : index
    %c0_2 = arith.constant 0 : index
    %1 = vector.load %arg2[%c0_1, %c0_2] : memref<32x64xbf16, #tpu.memory_space<vmem>>, vector<32x64xbf16>
    %cst = arith.constant dense<0.000000e+00> : vector<16x64xf32>
    %2 = tpu.matmul %0, %1, %cst {dimension_numbers = #tpu.dot_dimension_numbers<[1], [0], [0], [1], [0, 0, 1, 1], [], []>} : vector<16x32xbf16>, vector<32x64xbf16>, vector<16x64xf32> -> vector<16x64xf32>
    %c0_3 = arith.constant 0 : index
    %c0_4 = arith.constant 0 : index
    %3 = vector.load %arg3[%c0_3, %c0_4] : memref<1x64xf32, #tpu.memory_space<vmem>>, vector<1x64xf32>
    %4 = vector.broadcast %3 : vector<1x64xf32> to vector<16x64xf32>
    %5 = arith.addf %2, %4 : vector<16x64xf32>
    %cst_5 = arith.constant 0.000000e+00 : f32
    %6 = vector.broadcast %cst_5 : f32 to vector<16x64xf32>
    %7 = arith.maximumf %5, %6 : vector<16x64xf32>
    %8 = arith.truncf %7 : vector<16x64xf32> to vector<16x64xbf16>
    %c0_6 = arith.constant 0 : index
    %c0_7 = arith.constant 0 : index
    %9 = vector.load %arg4[%c0_6, %c0_7] : memref<64x32xbf16, #tpu.memory_space<vmem>>, vector<64x32xbf16>
    %cst_8 = arith.constant dense<0.000000e+00> : vector<16x32xf32>
    %10 = tpu.matmul %8, %9, %cst_8 {dimension_numbers = #tpu.dot_dimension_numbers<[1], [0], [0], [1], [0, 0, 1, 1], [], []>} : vector<16x64xbf16>, vector<64x32xbf16>, vector<16x32xf32> -> vector<16x32xf32>
    %c0_9 = arith.constant 0 : index
    %c0_10 = arith.constant 0 : index
    %11 = vector.load %arg5[%c0_9, %c0_10] : memref<1x32xf32, #tpu.memory_space<vmem>>, vector<1x32xf32>
    %12 = vector.broadcast %11 : vector<1x32xf32> to vector<16x32xf32>
    %13 = arith.addf %10, %12 : vector<16x32xf32>
    %cst_11 = arith.constant 0.000000e+00 : f32
    %14 = vector.broadcast %cst_11 : f32 to vector<16x32xf32>
    %15 = arith.maximumf %13, %14 : vector<16x32xf32>
    %16 = arith.truncf %15 : vector<16x32xf32> to vector<16x32xbf16>
    %c0_12 = arith.constant 0 : index
    %c0_13 = arith.constant 0 : index
    %17 = vector.load %arg6[%c0_12, %c0_13] : memref<32x8xbf16, #tpu.memory_space<vmem>>, vector<32x8xbf16>
    %cst_14 = arith.constant dense<0.000000e+00> : vector<16x8xf32>
    %18 = tpu.matmul %16, %17, %cst_14 {dimension_numbers = #tpu.dot_dimension_numbers<[1], [0], [0], [1], [0, 0, 1, 1], [], []>} : vector<16x32xbf16>, vector<32x8xbf16>, vector<16x8xf32> -> vector<16x8xf32>
    %c0_15 = arith.constant 0 : index
    %c0_16 = arith.constant 0 : index
    %19 = vector.load %arg7[%c0_15, %c0_16] : memref<1x8xf32, #tpu.memory_space<vmem>>, vector<1x8xf32>
    %20 = vector.broadcast %19 : vector<1x8xf32> to vector<16x8xf32>
    %21 = arith.addf %18, %20 : vector<16x8xf32>
    %c0_17 = arith.constant 0 : index
    %c0_18 = arith.constant 0 : index
    %22 = vector.load %arg8[%c0_17, %c0_18] : memref<16x8xf32, #tpu.memory_space<vmem>>, vector<16x8xf32>
    tpu.vector_store %arg8[%c0_17, %c0_18], %21 {strides = array<i32>} : memref<16x8xf32, #tpu.memory_space<vmem>>, vector<16x8xf32>,
    return
  }
  func.func @transform_0(%arg0: i32) -> (i32, i32) {
    %c0_i32 = arith.constant 0 : i32
    %c0_i32_0 = arith.constant 0 : i32
    return %arg0, %c0_i32 : i32, i32
  }
  func.func @transform_1(%arg0: i32) -> (i32, i32) {
    %c0_i32 = arith.constant 0 : i32
    %c0_i32_0 = arith.constant 0 : i32
    %c0_i32_1 = arith.constant 0 : i32
    return %c0_i32, %c0_i32_0 : i32, i32
  }
  func.func @transform_2(%arg0: i32) -> (i32, i32) {
    %c0_i32 = arith.constant 0 : i32
    %c0_i32_0 = arith.constant 0 : i32
    %c0_i32_1 = arith.constant 0 : i32
    return %c0_i32, %c0_i32_0 : i32, i32
  }
  func.func @transform_3(%arg0: i32) -> (i32, i32) {
    %c0_i32 = arith.constant 0 : i32
    %c0_i32_0 = arith.constant 0 : i32
    %c0_i32_1 = arith.constant 0 : i32
    return %c0_i32, %c0_i32_0 : i32, i32
  }
  func.func @transform_4(%arg0: i32) -> (i32, i32) {
    %c0_i32 = arith.constant 0 : i32
    %c0_i32_0 = arith.constant 0 : i32
    %c0_i32_1 = arith.constant 0 : i32
    return %c0_i32, %c0_i32_0 : i32, i32
  }
  func.func @transform_5(%arg0: i32) -> (i32, i32) {
    %c0_i32 = arith.constant 0 : i32
    %c0_i32_0 = arith.constant 0 : i32
    %c0_i32_1 = arith.constant 0 : i32
    return %c0_i32, %c0_i32_0 : i32, i32
  }
  func.func @transform_6(%arg0: i32) -> (i32, i32) {
    %c0_i32 = arith.constant 0 : i32
    %c0_i32_0 = arith.constant 0 : i32
    %c0_i32_1 = arith.constant 0 : i32
    return %c0_i32, %c0_i32_0 : i32, i32
  }
  func.func @transform_7(%arg0: i32) -> (i32, i32) {
    %c0_i32 = arith.constant 0 : i32
    %c0_i32_0 = arith.constant 0 : i32
    return %arg0, %c0_i32 : i32, i32
  }
}

</mosaic_0001>

<llo_original>
// kernel: simple_room_net.1
$region0: #{simple_room_net.1}
  #allocation0 [shape = 'u32[]', space=smem, size = 0x4, offset = 0x4, fixed_abs, tag = 'smem constant byte address 0x4 - core index']
  #allocation1 [shape = 'u32[72,128]{1,0:T(1,128)}', space=vmem, size = 0x9000, scoped, tag = 'internal scratch']
  %s0 = inlined_call_operand.vmem [shape: bf16[16,32], index: 0, kind: input, shape index: {}]
  %s1 = inlined_call_operand.vmem [shape: bf16[32,64], index: 1, kind: input, shape index: {}]
  %s2 = inlined_call_operand.vmem [shape: f32[1,64], index: 2, kind: input, shape index: {}]
  %s3 = inlined_call_operand.vmem [shape: bf16[64,32], index: 3, kind: input, shape index: {}]
  %s4 = inlined_call_operand.vmem [shape: f32[1,32], index: 4, kind: input, shape index: {}]
  %s5 = inlined_call_operand.vmem [shape: bf16[32,8], index: 5, kind: input, shape index: {}]
  %s6 = inlined_call_operand.vmem [shape: f32[1,8], index: 6, kind: input, shape index: {}]
  %s7 = inlined_call_operand.vmem [shape: f32[16,8], index: 7, kind: output, shape index: {}]
  %s8 = sld [smem:[#allocation0]]
  $region38: #{simple_room_net.1} parent=0
    _
  %s10 = ssub.s32 1, %s8
  %s11 = scalar_select 0, %s10, %s8
  // Predicated region
  $region2: #{simple_room_net.1} parent=0 // pred_check
    _
  $region3: #{simple_room_net.1} parent=0 // pred_check_branch
    %13 = sbr.rel (0) target = $region5
  $region4: #{simple_room_net.1} parent=0 // pred_region
    _
  $region5: #{simple_room_net.1} parent=0 // pred_fallthru
    _
  // Predicated region
  $region6: #{simple_room_net.1} parent=0 // pred_check
    _
  $region7: #{simple_room_net.1} parent=0 // pred_check_branch
    %15 = sbr.rel (0) target = $region9
  $region8: #{simple_room_net.1} parent=0 // pred_region
    _
  $region9: #{simple_room_net.1} parent=0 // pred_fallthru
    _
  // Predicated region
  $region10: #{simple_room_net.1} parent=0 // pred_check
    _
  $region11: #{simple_room_net.1} parent=0 // pred_check_branch
    %17 = sbr.rel (0) target = $region13
  $region12: #{simple_room_net.1} parent=0 // pred_region
    _
  $region13: #{simple_room_net.1} parent=0 // pred_fallthru
    _
  // Predicated region
  $region14: #{simple_room_net.1} parent=0 // pred_check
    _
  $region15: #{simple_room_net.1} parent=0 // pred_check_branch
    %19 = sbr.rel (0) target = $region17
  $region16: #{simple_room_net.1} parent=0 // pred_region
    _
  $region17: #{simple_room_net.1} parent=0 // pred_fallthru
    _
  // Predicated region
  $region18: #{simple_room_net.1} parent=0 // pred_check
    _
  $region19: #{simple_room_net.1} parent=0 // pred_check_branch
    %21 = sbr.rel (0) target = $region21
  $region20: #{simple_room_net.1} parent=0 // pred_region
    _
  $region21: #{simple_room_net.1} parent=0 // pred_fallthru
    _
  // Predicated region
  $region22: #{simple_room_net.1} parent=0 // pred_check
    _
  $region23: #{simple_room_net.1} parent=0 // pred_check_branch
    %23 = sbr.rel (0) target = $region25
  $region24: #{simple_room_net.1} parent=0 // pred_region
    _
  $region25: #{simple_room_net.1} parent=0 // pred_fallthru
    _
  // Predicated region
  $region26: #{simple_room_net.1} parent=0 // pred_check
    _
  $region27: #{simple_room_net.1} parent=0 // pred_check_branch
    %25 = sbr.rel (0) target = $region29
  $region28: #{simple_room_net.1} parent=0 // pred_region
    _
  $region29: #{simple_room_net.1} parent=0 // pred_fallthru
    _
  %v27 = vld [vmem:[%s0] sm:$0xf]
  %v28 = vld [vmem:[%s0 + $0x4] sm:$0xf]
  %v29 = vld [vmem:[%s1] sm:$0xf]
  %v30 = vld [vmem:[%s1 + $0x4] sm:$0xf]
  %v31 = vld [vmem:[%s1 + $0x8] sm:$0xf]
  %v32 = vld [vmem:[%s1 + $0xc] sm:$0xf]
  %v33 = vld [vmem:[%s2] sm:$0x1]
  %v35 = vperm.slane %v33, 0
  %v39 = vunpack.c.l.b16 %v27
  %v40 = vunpack.c.l.b16 %v28
  %v41 = vpack.c.b16 %v40, %v39
  %v46 = vunpack.c.l.b16 %v29
  %v47 = vunpack.c.l.b16 %v30
  %v48 = vunpack.c.l.b16 %v31
  %v49 = vunpack.c.l.b16 %v32
  %v50 = vpack.c.b16 %v47, %v46
  %v51 = vpack.c.b16 %v49, %v48
  %vm54 = vcmask 261120
  %v56 = vsel %vm54, %v41, 0
  %58 = vmatpush.bf16.msra.mxu0 0
  %59 = vmatpush.bf16.msra.mxu0 0
  %60 = vmatpush.bf16.msra.mxu0 0
  %61 = vmatpush.bf16.msra.mxu0 0
  %62 = vmatpush.bf16.msra.mxu0 0
  %63 = vmatpush.bf16.msra.mxu0 0
  %64 = vmatpush.bf16.msra.mxu0 %v51
  %65 = vmatpush.bf16.msra.mxu0 %v50
  %66 = vmatmul.bf16.gmra.mxu0 %v56
  %v67 = vpop.f32.mrf.mxu0
  %v68 = vadd.f32 %v35, %v67
  %v69 = vpop.f32.mrf.mxu0
  %v70 = vadd.f32 %v35, %v69
  %71 = vdwg.mxu0
  %v72 = vmax.f32 %v68, 0.0
  %v73 = vmax.f32 %v70, 0.0
  %v74 = vpack.c.bf16 %v73, %v72
  %v75 = vld [vmem:[%s3] sm:$0xf]
  %v76 = vld [vmem:[%s3 + $0x4] sm:$0xf]
  %v77 = vld [vmem:[%s3 + $0x8] sm:$0xf]
  %v78 = vld [vmem:[%s3 + $0xc] sm:$0xf]
  %v79 = vld [vmem:[%s3 + $0x10] sm:$0xf]
  %v80 = vld [vmem:[%s3 + $0x14] sm:$0xf]
  %v81 = vld [vmem:[%s3 + $0x18] sm:$0xf]
  %v82 = vld [vmem:[%s3 + $0x1c] sm:$0xf]
  %v83 = vld [vmem:[%s4] sm:$0x1]
  %v85 = vperm.slane %v83, 0
  %v95 = vunpack.c.l.b16 %v75
  %v96 = vunpack.c.l.b16 %v76
  %v97 = vunpack.c.l.b16 %v77
  %v98 = vunpack.c.l.b16 %v78
  %v99 = vunpack.c.l.b16 %v79
  %v100 = vunpack.c.l.b16 %v80
  %v101 = vunpack.c.l.b16 %v81
  %v102 = vunpack.c.l.b16 %v82
  %v103 = vpack.c.b16 %v96, %v95
  %v104 = vpack.c.b16 %v98, %v97
  %v105 = vpack.c.b16 %v100, %v99
  %v106 = vpack.c.b16 %v102, %v101
  %vm111 = vcmask 523264
  %v113 = vsel %vm111, %v74, 0
  %115 = vmatpush.bf16.msra.mxu0 0
  %116 = vmatpush.bf16.msra.mxu0 0
  %117 = vmatpush.bf16.msra.mxu0 0
  %118 = vmatpush.bf16.msra.mxu0 0
  %119 = vmatpush.bf16.msra.mxu0 %v106
  %120 = vmatpush.bf16.msra.mxu0 %v105
  %121 = vmatpush.bf16.msra.mxu0 %v104
  %122 = vmatpush.bf16.msra.mxu0 %v103
  %123 = vmatmul.bf16.gmra.mxu0 %v113
  %v124 = vpop.f32.mrf.mxu0
  %v125 = vadd.f32 %v85, %v124
  %v126 = vpop.f32.mrf.mxu0
  %v127 = vadd.f32 %v85, %v126
  %128 = vdwg.mxu0
  %v129 = vmax.f32 %v125, 0.0
  %v130 = vmax.f32 %v127, 0.0
  %v131 = vpack.c.bf16 %v130, %v129
  %v132 = vld [vmem:[%s5] sm:$0xf]
  %v133 = vld [vmem:[%s5 + $0x4] sm:$0xf]
  %v134 = vld [vmem:[%s5 + $0x8] sm:$0xf]
  %v135 = vld [vmem:[%s5 + $0xc] sm:$0xf]
  %v136 = vld [vmem:[%s6] sm:$0x1]
  %v138 = vperm.slane %v136, 0
  %v144 = vunpack.c.l.b16 %v132
  %v145 = vunpack.c.l.b16 %v133
  %v146 = vunpack.c.l.b16 %v134
  %v147 = vunpack.c.l.b16 %v135
  %v148 = vpack.c.b16 %v145, %v144
  %v149 = vpack.c.b16 %v147, %v146
  %v153 = vsel %vm54, %v131, 0
  %155 = vmatpush.bf16.msra.mxu0 0
  %156 = vmatpush.bf16.msra.mxu0 0
  %157 = vmatpush.bf16.msra.mxu0 0
  %158 = vmatpush.bf16.msra.mxu0 0
  %159 = vmatpush.bf16.msra.mxu0 0
  %160 = vmatpush.bf16.msra.mxu0 0
  %161 = vmatpush.bf16.msra.mxu0 %v149
  %162 = vmatpush.bf16.msra.mxu0 %v148
  %163 = vmatmul.bf16.gmra.mxu0 %v153
  %v164 = vpop.f32.mrf.mxu0
  %v165 = vadd.f32 %v138, %v164
  %v166 = vpop.f32.mrf.mxu0
  %v167 = vadd.f32 %v138, %v166
  %168 = vdwg.mxu0
  %vm169 = vcmask 64512
  %170 = vst.msk [vmem:[%s7] sm:$0xff] %vm169, %v165
  %171 = vst.msk [vmem:[%s7 + $0x8] sm:$0xff] %vm169, %v167
  // Predicated region
  $region30: #{simple_room_net.1} parent=0 // pred_check
    _
  $region31: #{simple_room_net.1} parent=0 // pred_check_branch
    %173 = sbr.rel (0) target = $region33
  $region32: #{simple_room_net.1} parent=0 // pred_region
    _
  $region33: #{simple_room_net.1} parent=0 // pred_fallthru
    _
  // Predicated region
  $region34: #{simple_room_net.1} parent=0 // pred_check
    _
  $region35: #{simple_room_net.1} parent=0 // pred_check_branch
    %175 = sbr.rel (0) target = $region37
  $region36: #{simple_room_net.1} parent=0 // pred_region
    _
  $region37: #{simple_room_net.1} parent=0 // pred_fallthru
    _

</llo_original>
